<compile_context>
chip_gen: v6e
topology: v6e:2x2x1
jax: 0.10.0
libtpu: 0.0.40
codegen_flags: <defaults>
</compile_context>

<pallas_src>
import functools
import math

import jax
import jax.numpy as jnp
from jax import lax
from jax.experimental import pallas as pl
from jax.experimental.pallas import tpu as pltpu


def _attn_batch_kernel(x_ref, wqkv_ref, bqkv_ref, wp_ref, bp_ref, o_ref,
                       *, num_heads, head_dim):
    """One batch element per grid step: fused QKV projection, per-head softmax
    attention (statically unrolled), and fused output projection."""
    H, D = num_heads, head_dim
    C = H * D

    x = x_ref[0].astype(jnp.bfloat16)                                 # (T, C)
    T = x.shape[0]

    # Fused QKV projection for ALL heads: one lane-dense (T,C)x(C,3C) MXU
    # matmul, f32 accumulation.  1/sqrt(D) is already folded into the Wq/bq
    # columns on the wrapper side.
    qkv = jnp.dot(x, wqkv_ref[...],
                  preferred_element_type=jnp.float32) + bqkv_ref[...]  # (T, 3C) f32

    acc = jnp.zeros((T, C), jnp.float32)                              # register accum
    for h in range(H):                       # static unrolled head loop (H known)
        q = qkv[:, h * D:(h + 1) * D].astype(jnp.bfloat16)            # (T, D)
        k = qkv[:, C + h * D:C + (h + 1) * D].astype(jnp.bfloat16)    # (T, D)
        v = qkv[:, 2 * C + h * D:2 * C + (h + 1) * D].astype(jnp.bfloat16)

        # q @ k^T without an explicit transpose (contract last dim of both).
        att = lax.dot_general(q, k, (((1,), (1,)), ((), ())),
                              preferred_element_type=jnp.float32)     # (T, T)
        # Mask: module's buffer is all ones -> masked_fill never fires; dropped.
        att = att - jnp.max(att, axis=-1, keepdims=True)
        p = jnp.exp(att)
        p = p * pl.reciprocal(jnp.sum(p, axis=-1, keepdims=True), approx=True)
        # attn_drop: identity (eval mode).

        y = jnp.dot(p.astype(jnp.bfloat16), v,
                    preferred_element_type=jnp.float32)               # (T, D)

        # Fused "concat heads + output projection": acc += y_h @ Wp_h.
        acc = acc + jnp.dot(y.astype(jnp.bfloat16), wp_ref[h],
                            preferred_element_type=jnp.float32)       # (T, C)

    # resid_drop: identity (eval mode).
    o_ref[0] = (acc + bp_ref[...]).astype(o_ref.dtype)


def causal_self_attention(x, params, num_heads):
    """x: (B, T, C) float32. params: PyTorch-layout nn.Linear weights/biases."""
    B, T, C = x.shape
    H = num_heads
    D = C // H
    scale = 1.0 / math.sqrt(D)

    # ---- one-time wrapper-side weight plumbing (constant prep, not per-step) ----
    # nn.Linear: y = x @ W.T + b with W (out, in); pre-transpose to (in, out).
    # Fold the 1/sqrt(D) attention scale into the query projection.
    wq_t = params["wq"].T * scale                     # (C, C)
    wk_t = params["wk"].T
    wv_t = params["wv"].T
    wqkv = jnp.concatenate([wq_t, wk_t, wv_t], axis=1).astype(jnp.bfloat16)  # (C, 3C)

    bqkv = jnp.concatenate([params["bq"] * scale,
                            params["bk"],
                            params["bv"]], axis=1)    # (1, 3C) f32

    wp_h = params["wp"].T.reshape(H, D, C).astype(jnp.bfloat16)   # (H, D, C)
    bp = params["bp"]                                              # (1, C) f32

    kernel = functools.partial(_attn_batch_kernel, num_heads=H, head_dim=D)

    return pl.pallas_call(
        kernel,
        out_shape=jax.ShapeDtypeStruct((B, T, C), x.dtype),
        grid=(B,),
        in_specs=[
            pl.BlockSpec((1, T, C), lambda b: (b, 0, 0)),       # x (per batch)
            pl.BlockSpec((C, 3 * C), lambda b: (0, 0)),         # fused QKV weight
            pl.BlockSpec((1, 3 * C), lambda b: (0, 0)),         # fused QKV bias
            pl.BlockSpec((H, D, C), lambda b: (0, 0, 0)),       # per-head Wp slices
            pl.BlockSpec((1, C), lambda b: (0, 0)),             # proj bias
        ],
        out_specs=pl.BlockSpec((1, T, C), lambda b: (b, 0, 0)),
        compiler_params=pltpu.CompilerParams(
            dimension_semantics=("parallel",)),
    )(x, wqkv, bqkv, wp_h, bp)


def _reference(x, params, num_heads):
    """Pure-JAX f32 reference mirroring the PyTorch forward (eval mode)."""
    B, T, C = x.shape
    D = C // num_heads

    def lin(v, w, b):
        return jnp.einsum("btc,oc->bto", v, w) + b[0]

    q = lin(x, params["wq"], params["bq"]).reshape(B, T, num_heads, D).transpose(0, 2, 1, 3)
    k = lin(x, params["wk"], params["bk"]).reshape(B, T, num_heads, D).transpose(0, 2, 1, 3)
    v = lin(x, params["wv"], params["bv"]).reshape(B, T, num_heads, D).transpose(0, 2, 1, 3)

    att = jnp.einsum("bhtd,bhsd->bhts", q, k) * (1.0 / math.sqrt(D))
    mask = jnp.ones((T, T), jnp.float32)        # module's registered all-ones buffer
    att = jnp.where(mask[None, None] == 0, -jnp.inf, att)
    att = jax.nn.softmax(att, axis=-1)
    y = jnp.einsum("bhts,bhsd->bhtd", att, v)
    y = y.transpose(0, 2, 1, 3).reshape(B, T, C)
    return lin(y, params["wp"], params["bp"])


if __name__ == "__main__":
    # Small shapes consistent with the module's forward.
    B, T, C = 2, 8, 32
    num_heads = 4

    key = jax.random.PRNGKey(0)
    keys = jax.random.split(key, 9)
    scale = 0.02
    params = {
        "wq": scale * jax.random.normal(keys[0], (C, C), jnp.float32),
        "bq": scale * jax.random.normal(keys[1], (1, C), jnp.float32),
        "wk": scale * jax.random.normal(keys[2], (C, C), jnp.float32),
        "bk": scale * jax.random.normal(keys[3], (1, C), jnp.float32),
        "wv": scale * jax.random.normal(keys[4], (C, C), jnp.float32),
        "bv": scale * jax.random.normal(keys[5], (1, C), jnp.float32),
        "wp": scale * jax.random.normal(keys[6], (C, C), jnp.float32),
        "bp": scale * jax.random.normal(keys[7], (1, C), jnp.float32),
    }
    x = jax.random.normal(keys[8], (B, T, C), jnp.float32)

    out = causal_self_attention(x, params, num_heads)
    out = jax.block_until_ready(out)

    ref = _reference(x, params, num_heads)
    assert out.shape == (B, T, C)
    # bf16 MXU matmuls + approx reciprocal => compare against f32 reference loosely.
    max_err = float(jnp.max(jnp.abs(out - ref)))
    assert jnp.allclose(out, ref, atol=1e-2, rtol=1e-2), f"mismatch vs reference ({max_err})"

    print("KERNEL_OK")
</pallas_src>

<mosaic_0001>
module attributes {stable_mosaic.version = 11 : i64} {
  func.func @_attn_batch_kernel(%arg0: i32, %arg1: memref<1x8x32xf32, #tpu.memory_space<vmem>>, %arg2: memref<32x96xbf16, #tpu.memory_space<vmem>>, %arg3: memref<1x96xf32, #tpu.memory_space<vmem>>, %arg4: memref<4x8x32xbf16, #tpu.memory_space<vmem>>, %arg5: memref<1x32xf32, #tpu.memory_space<vmem>>, %arg6: memref<1x8x32xf32, #tpu.memory_space<vmem>>) attributes {dimension_semantics = [#tpu.dimension_semantics<parallel>], iteration_bounds = array<i64: 2>, scalar_prefetch = 0 : i64, scratch_operands = 0 : i64, tpu.core_type = #tpu.core_type<tc>, window_params = [{transform_indices = @transform_0, window_bounds = array<i64: 1, 8, 32>}, {pipeline_mode = #tpu.pipeline_mode<synchronous>, transform_indices = @transform_1, window_bounds = array<i64: 32, 96>}, {pipeline_mode = #tpu.pipeline_mode<synchronous>, transform_indices = @transform_2, window_bounds = array<i64: 1, 96>}, {pipeline_mode = #tpu.pipeline_mode<synchronous>, transform_indices = @transform_3, window_bounds = array<i64: 4, 8, 32>}, {pipeline_mode = #tpu.pipeline_mode<synchronous>, transform_indices = @transform_4, window_bounds = array<i64: 1, 32>}, {transform_indices = @transform_5, window_bounds = array<i64: 1, 8, 32>}]} {
    %c0 = arith.constant 0 : index
    %c0_0 = arith.constant 0 : index
    %c0_1 = arith.constant 0 : index
    %0 = vector.load %arg1[%c0, %c0_0, %c0_1] : memref<1x8x32xf32, #tpu.memory_space<vmem>>, vector<1x8x32xf32>
    %1 = vector.shape_cast %0 : vector<1x8x32xf32> to vector<8x32xf32>
    %2 = arith.truncf %1 : vector<8x32xf32> to vector<8x32xbf16>
    %c0_2 = arith.constant 0 : index
    %c0_3 = arith.constant 0 : index
    %3 = vector.load %arg2[%c0_2, %c0_3] : memref<32x96xbf16, #tpu.memory_space<vmem>>, vector<32x96xbf16>
    %cst = arith.constant dense<0.000000e+00> : vector<8x96xf32>
    %4 = tpu.matmul %2, %3, %cst {dimension_numbers = #tpu.dot_dimension_numbers<[1], [0], [0], [1], [0, 0, 1, 1], [], []>} : vector<8x32xbf16>, vector<32x96xbf16>, vector<8x96xf32> -> vector<8x96xf32>
    %c0_4 = arith.constant 0 : index
    %c0_5 = arith.constant 0 : index
    %5 = vector.load %arg3[%c0_4, %c0_5] : memref<1x96xf32, #tpu.memory_space<vmem>>, vector<1x96xf32>
    %6 = vector.broadcast %5 : vector<1x96xf32> to vector<8x96xf32>
    %7 = arith.addf %4, %6 : vector<8x96xf32>
    %cst_6 = arith.constant 0.000000e+00 : f32
    %8 = vector.broadcast %cst_6 : f32 to vector<8x32xf32>
    %9 = vector.extract_strided_slice %7 {offsets = [0, 0], sizes = [8, 8], strides = [1, 1]} : vector<8x96xf32> to vector<8x8xf32>
    %10 = arith.truncf %9 : vector<8x8xf32> to vector<8x8xbf16>
    %11 = vector.extract_strided_slice %7 {offsets = [0, 32], sizes = [8, 8], strides = [1, 1]} : vector<8x96xf32> to vector<8x8xf32>
    %12 = arith.truncf %11 : vector<8x8xf32> to vector<8x8xbf16>
    %13 = vector.extract_strided_slice %7 {offsets = [0, 64], sizes = [8, 8], strides = [1, 1]} : vector<8x96xf32> to vector<8x8xf32>
    %14 = arith.truncf %13 : vector<8x8xf32> to vector<8x8xbf16>
    %cst_7 = arith.constant dense<0.000000e+00> : vector<8x8xf32>
    %15 = tpu.matmul %10, %12, %cst_7 {dimension_numbers = #tpu.dot_dimension_numbers<[1], [1], [0], [0], [0, 0, 1, 0], [], []>} : vector<8x8xbf16>, vector<8x8xbf16>, vector<8x8xf32> -> vector<8x8xf32>
    %cst_8 = arith.constant dense<0xFF800000> : vector<8xf32>
    %16 = vector.multi_reduction <maximumf>, %15, %cst_8 [1] : vector<8x8xf32> to vector<8xf32>
    %17 = vector.shape_cast %16 : vector<8xf32> to vector<8x1xf32>
    %18 = vector.broadcast %17 : vector<8x1xf32> to vector<8x8xf32>
    %19 = arith.subf %15, %18 : vector<8x8xf32>
    %20 = math.exp %19 : vector<8x8xf32>
    %cst_9 = arith.constant dense<0.000000e+00> : vector<8xf32>
    %21 = vector.multi_reduction <add>, %20, %cst_9 [1] : vector<8x8xf32> to vector<8xf32>
    %22 = vector.shape_cast %21 : vector<8xf32> to vector<8x1xf32>
    %23 = tpu.reciprocal %22 {approx = true} : vector<8x1xf32> -> vector<8x1xf32>
    %24 = vector.broadcast %23 : vector<8x1xf32> to vector<8x8xf32>
    %25 = arith.mulf %20, %24 : vector<8x8xf32>
    %26 = arith.truncf %25 : vector<8x8xf32> to vector<8x8xbf16>
    %cst_10 = arith.constant dense<0.000000e+00> : vector<8x8xf32>
    %27 = tpu.matmul %26, %14, %cst_10 {dimension_numbers = #tpu.dot_dimension_numbers<[1], [0], [0], [1], [0, 0, 1, 1], [], []>} : vector<8x8xbf16>, vector<8x8xbf16>, vector<8x8xf32> -> vector<8x8xf32>
    %28 = arith.truncf %27 : vector<8x8xf32> to vector<8x8xbf16>
    %c0_11 = arith.constant 0 : index
    %c0_12 = arith.constant 0 : index
    %c0_13 = arith.constant 0 : index
    %29 = vector.load %arg4[%c0_11, %c0_12, %c0_13] : memref<4x8x32xbf16, #tpu.memory_space<vmem>>, vector<1x8x32xbf16>
    %30 = vector.shape_cast %29 : vector<1x8x32xbf16> to vector<8x32xbf16>
    %cst_14 = arith.constant dense<0.000000e+00> : vector<8x32xf32>
    %31 = tpu.matmul %28, %30, %cst_14 {dimension_numbers = #tpu.dot_dimension_numbers<[1], [0], [0], [1], [0, 0, 1, 1], [], []>} : vector<8x8xbf16>, vector<8x32xbf16>, vector<8x32xf32> -> vector<8x32xf32>
    %32 = arith.addf %8, %31 : vector<8x32xf32>
    %33 = vector.extract_strided_slice %7 {offsets = [0, 8], sizes = [8, 8], strides = [1, 1]} : vector<8x96xf32> to vector<8x8xf32>
    %34 = arith.truncf %33 : vector<8x8xf32> to vector<8x8xbf16>
    %35 = vector.extract_strided_slice %7 {offsets = [0, 40], sizes = [8, 8], strides = [1, 1]} : vector<8x96xf32> to vector<8x8xf32>
    %36 = arith.truncf %35 : vector<8x8xf32> to vector<8x8xbf16>
    %37 = vector.extract_strided_slice %7 {offsets = [0, 72], sizes = [8, 8], strides = [1, 1]} : vector<8x96xf32> to vector<8x8xf32>
    %38 = arith.truncf %37 : vector<8x8xf32> to vector<8x8xbf16>
    %cst_15 = arith.constant dense<0.000000e+00> : vector<8x8xf32>
    %39 = tpu.matmul %34, %36, %cst_15 {dimension_numbers = #tpu.dot_dimension_numbers<[1], [1], [0], [0], [0, 0, 1, 0], [], []>} : vector<8x8xbf16>, vector<8x8xbf16>, vector<8x8xf32> -> vector<8x8xf32>
    %cst_16 = arith.constant dense<0xFF800000> : vector<8xf32>
    %40 = vector.multi_reduction <maximumf>, %39, %cst_16 [1] : vector<8x8xf32> to vector<8xf32>
    %41 = vector.shape_cast %40 : vector<8xf32> to vector<8x1xf32>
    %42 = vector.broadcast %41 : vector<8x1xf32> to vector<8x8xf32>
    %43 = arith.subf %39, %42 : vector<8x8xf32>
    %44 = math.exp %43 : vector<8x8xf32>
    %cst_17 = arith.constant dense<0.000000e+00> : vector<8xf32>
    %45 = vector.multi_reduction <add>, %44, %cst_17 [1] : vector<8x8xf32> to vector<8xf32>
    %46 = vector.shape_cast %45 : vector<8xf32> to vector<8x1xf32>
    %47 = tpu.reciprocal %46 {approx = true} : vector<8x1xf32> -> vector<8x1xf32>
    %48 = vector.broadcast %47 : vector<8x1xf32> to vector<8x8xf32>
    %49 = arith.mulf %44, %48 : vector<8x8xf32>
    %50 = arith.truncf %49 : vector<8x8xf32> to vector<8x8xbf16>
    %cst_18 = arith.constant dense<0.000000e+00> : vector<8x8xf32>
    %51 = tpu.matmul %50, %38, %cst_18 {dimension_numbers = #tpu.dot_dimension_numbers<[1], [0], [0], [1], [0, 0, 1, 1], [], []>} : vector<8x8xbf16>, vector<8x8xbf16>, vector<8x8xf32> -> vector<8x8xf32>
    %52 = arith.truncf %51 : vector<8x8xf32> to vector<8x8xbf16>
    %c1 = arith.constant 1 : index
    %c0_19 = arith.constant 0 : index
    %c0_20 = arith.constant 0 : index
    %53 = vector.load %arg4[%c1, %c0_19, %c0_20] : memref<4x8x32xbf16, #tpu.memory_space<vmem>>, vector<1x8x32xbf16>
    %54 = vector.shape_cast %53 : vector<1x8x32xbf16> to vector<8x32xbf16>
    %cst_21 = arith.constant dense<0.000000e+00> : vector<8x32xf32>
    %55 = tpu.matmul %52, %54, %cst_21 {dimension_numbers = #tpu.dot_dimension_numbers<[1], [0], [0], [1], [0, 0, 1, 1], [], []>} : vector<8x8xbf16>, vector<8x32xbf16>, vector<8x32xf32> -> vector<8x32xf32>
    %56 = arith.addf %32, %55 : vector<8x32xf32>
    %57 = vector.extract_strided_slice %7 {offsets = [0, 16], sizes = [8, 8], strides = [1, 1]} : vector<8x96xf32> to vector<8x8xf32>
    %58 = arith.truncf %57 : vector<8x8xf32> to vector<8x8xbf16>
    %59 = vector.extract_strided_slice %7 {offsets = [0, 48], sizes = [8, 8], strides = [1, 1]} : vector<8x96xf32> to vector<8x8xf32>
    %60 = arith.truncf %59 : vector<8x8xf32> to vector<8x8xbf16>
    %61 = vector.extract_strided_slice %7 {offsets = [0, 80], sizes = [8, 8], strides = [1, 1]} : vector<8x96xf32> to vector<8x8xf32>
    %62 = arith.truncf %61 : vector<8x8xf32> to vector<8x8xbf16>
    %cst_22 = arith.constant dense<0.000000e+00> : vector<8x8xf32>
    %63 = tpu.matmul %58, %60, %cst_22 {dimension_numbers = #tpu.dot_dimension_numbers<[1], [1], [0], [0], [0, 0, 1, 0], [], []>} : vector<8x8xbf16>, vector<8x8xbf16>, vector<8x8xf32> -> vector<8x8xf32>
    %cst_23 = arith.constant dense<0xFF800000> : vector<8xf32>
    %64 = vector.multi_reduction <maximumf>, %63, %cst_23 [1] : vector<8x8xf32> to vector<8xf32>
    %65 = vector.shape_cast %64 : vector<8xf32> to vector<8x1xf32>
    %66 = vector.broadcast %65 : vector<8x1xf32> to vector<8x8xf32>
    %67 = arith.subf %63, %66 : vector<8x8xf32>
    %68 = math.exp %67 : vector<8x8xf32>
    %cst_24 = arith.constant dense<0.000000e+00> : vector<8xf32>
    %69 = vector.multi_reduction <add>, %68, %cst_24 [1] : vector<8x8xf32> to vector<8xf32>
    %70 = vector.shape_cast %69 : vector<8xf32> to vector<8x1xf32>
    %71 = tpu.reciprocal %70 {approx = true} : vector<8x1xf32> -> vector<8x1xf32>
    %72 = vector.broadcast %71 : vector<8x1xf32> to vector<8x8xf32>
    %73 = arith.mulf %68, %72 : vector<8x8xf32>
    %74 = arith.truncf %73 : vector<8x8xf32> to vector<8x8xbf16>
    %cst_25 = arith.constant dense<0.000000e+00> : vector<8x8xf32>
    %75 = tpu.matmul %74, %62, %cst_25 {dimension_numbers = #tpu.dot_dimension_numbers<[1], [0], [0], [1], [0, 0, 1, 1], [], []>} : vector<8x8xbf16>, vector<8x8xbf16>, vector<8x8xf32> -> vector<8x8xf32>
    %76 = arith.truncf %75 : vector<8x8xf32> to vector<8x8xbf16>
    %c2 = arith.constant 2 : index
    %c0_26 = arith.constant 0 : index
    %c0_27 = arith.constant 0 : index
    %77 = vector.load %arg4[%c2, %c0_26, %c0_27] : memref<4x8x32xbf16, #tpu.memory_space<vmem>>, vector<1x8x32xbf16>
    %78 = vector.shape_cast %77 : vector<1x8x32xbf16> to vector<8x32xbf16>
    %cst_28 = arith.constant dense<0.000000e+00> : vector<8x32xf32>
    %79 = tpu.matmul %76, %78, %cst_28 {dimension_numbers = #tpu.dot_dimension_numbers<[1], [0], [0], [1], [0, 0, 1, 1], [], []>} : vector<8x8xbf16>, vector<8x32xbf16>, vector<8x32xf32> -> vector<8x32xf32>
    %80 = arith.addf %56, %79 : vector<8x32xf32>
    %81 = vector.extract_strided_slice %7 {offsets = [0, 24], sizes = [8, 8], strides = [1, 1]} : vector<8x96xf32> to vector<8x8xf32>
    %82 = arith.truncf %81 : vector<8x8xf32> to vector<8x8xbf16>
    %83 = vector.extract_strided_slice %7 {offsets = [0, 56], sizes = [8, 8], strides = [1, 1]} : vector<8x96xf32> to vector<8x8xf32>
    %84 = arith.truncf %83 : vector<8x8xf32> to vector<8x8xbf16>
    %85 = vector.extract_strided_slice %7 {offsets = [0, 88], sizes = [8, 8], strides = [1, 1]} : vector<8x96xf32> to vector<8x8xf32>
    %86 = arith.truncf %85 : vector<8x8xf32> to vector<8x8xbf16>
    %cst_29 = arith.constant dense<0.000000e+00> : vector<8x8xf32>
    %87 = tpu.matmul %82, %84, %cst_29 {dimension_numbers = #tpu.dot_dimension_numbers<[1], [1], [0], [0], [0, 0, 1, 0], [], []>} : vector<8x8xbf16>, vector<8x8xbf16>, vector<8x8xf32> -> vector<8x8xf32>
    %cst_30 = arith.constant dense<0xFF800000> : vector<8xf32>
    %88 = vector.multi_reduction <maximumf>, %87, %cst_30 [1] : vector<8x8xf32> to vector<8xf32>
    %89 = vector.shape_cast %88 : vector<8xf32> to vector<8x1xf32>
    %90 = vector.broadcast %89 : vector<8x1xf32> to vector<8x8xf32>
    %91 = arith.subf %87, %90 : vector<8x8xf32>
    %92 = math.exp %91 : vector<8x8xf32>
    %cst_31 = arith.constant dense<0.000000e+00> : vector<8xf32>
    %93 = vector.multi_reduction <add>, %92, %cst_31 [1] : vector<8x8xf32> to vector<8xf32>
    %94 = vector.shape_cast %93 : vector<8xf32> to vector<8x1xf32>
    %95 = tpu.reciprocal %94 {approx = true} : vector<8x1xf32> -> vector<8x1xf32>
    %96 = vector.broadcast %95 : vector<8x1xf32> to vector<8x8xf32>
    %97 = arith.mulf %92, %96 : vector<8x8xf32>
    %98 = arith.truncf %97 : vector<8x8xf32> to vector<8x8xbf16>
    %cst_32 = arith.constant dense<0.000000e+00> : vector<8x8xf32>
    %99 = tpu.matmul %98, %86, %cst_32 {dimension_numbers = #tpu.dot_dimension_numbers<[1], [0], [0], [1], [0, 0, 1, 1], [], []>} : vector<8x8xbf16>, vector<8x8xbf16>, vector<8x8xf32> -> vector<8x8xf32>
    %100 = arith.truncf %99 : vector<8x8xf32> to vector<8x8xbf16>
    %c3 = arith.constant 3 : index
    %c0_33 = arith.constant 0 : index
    %c0_34 = arith.constant 0 : index
    %101 = vector.load %arg4[%c3, %c0_33, %c0_34] : memref<4x8x32xbf16, #tpu.memory_space<vmem>>, vector<1x8x32xbf16>
    %102 = vector.shape_cast %101 : vector<1x8x32xbf16> to vector<8x32xbf16>
    %cst_35 = arith.constant dense<0.000000e+00> : vector<8x32xf32>
    %103 = tpu.matmul %100, %102, %cst_35 {dimension_numbers = #tpu.dot_dimension_numbers<[1], [0], [0], [1], [0, 0, 1, 1], [], []>} : vector<8x8xbf16>, vector<8x32xbf16>, vector<8x32xf32> -> vector<8x32xf32>
    %104 = arith.addf %80, %103 : vector<8x32xf32>
    %c0_36 = arith.constant 0 : index
    %c0_37 = arith.constant 0 : index
    %105 = vector.load %arg5[%c0_36, %c0_37] : memref<1x32xf32, #tpu.memory_space<vmem>>, vector<1x32xf32>
    %106 = vector.broadcast %105 : vector<1x32xf32> to vector<8x32xf32>
    %107 = arith.addf %104, %106 : vector<8x32xf32>
    %c0_38 = arith.constant 0 : index
    %c0_39 = arith.constant 0 : index
    %c0_40 = arith.constant 0 : index
    %108 = vector.load %arg6[%c0_38, %c0_39, %c0_40] : memref<1x8x32xf32, #tpu.memory_space<vmem>>, vector<1x8x32xf32>
    %109 = vector.shape_cast %108 : vector<1x8x32xf32> to vector<8x32xf32>
    %110 = vector.shape_cast %107 : vector<8x32xf32> to vector<1x8x32xf32>
    tpu.vector_store %arg6[%c0_38, %c0_39, %c0_40], %110 {strides = array<i32>} : memref<1x8x32xf32, #tpu.memory_space<vmem>>, vector<1x8x32xf32>,
    return
  }
  func.func @transform_0(%arg0: i32) -> (i32, i32, i32) {
    %c0_i32 = arith.constant 0 : i32
    %c0_i32_0 = arith.constant 0 : i32
    %c0_i32_1 = arith.constant 0 : i32
    return %arg0, %c0_i32, %c0_i32_0 : i32, i32, i32
  }
  func.func @transform_1(%arg0: i32) -> (i32, i32) {
    %c0_i32 = arith.constant 0 : i32
    %c0_i32_0 = arith.constant 0 : i32
    %c0_i32_1 = arith.constant 0 : i32
    return %c0_i32, %c0_i32_0 : i32, i32
  }
  func.func @transform_2(%arg0: i32) -> (i32, i32) {
    %c0_i32 = arith.constant 0 : i32
    %c0_i32_0 = arith.constant 0 : i32
    %c0_i32_1 = arith.constant 0 : i32
    return %c0_i32, %c0_i32_0 : i32, i32
  }
  func.func @transform_3(%arg0: i32) -> (i32, i32, i32) {
    %c0_i32 = arith.constant 0 : i32
    %c0_i32_0 = arith.constant 0 : i32
    %c0_i32_1 = arith.constant 0 : i32
    %c0_i32_2 = arith.constant 0 : i32
    return %c0_i32, %c0_i32_0, %c0_i32_1 : i32, i32, i32
  }
  func.func @transform_4(%arg0: i32) -> (i32, i32) {
    %c0_i32 = arith.constant 0 : i32
    %c0_i32_0 = arith.constant 0 : i32
    %c0_i32_1 = arith.constant 0 : i32
    return %c0_i32, %c0_i32_0 : i32, i32
  }
  func.func @transform_5(%arg0: i32) -> (i32, i32, i32) {
    %c0_i32 = arith.constant 0 : i32
    %c0_i32_0 = arith.constant 0 : i32
    %c0_i32_1 = arith.constant 0 : i32
    return %arg0, %c0_i32, %c0_i32_0 : i32, i32, i32
  }
}

</mosaic_0001>

<llo_original>
// kernel: tpu_custom_call.1
$region0: #{tpu_custom_call.1}
  #allocation0 [shape = 'u32[]', space=smem, size = 0x4, offset = 0x4, fixed_abs, tag = 'smem constant byte address 0x4 - core index']
  #allocation1 [shape = 'u32[144,128]{1,0:T(1,128)}', space=vmem, size = 0x12000, scoped, tag = 'internal scratch']
  %s0 = inlined_call_operand.hbm [shape: f32[2,8,32], index: 0, kind: input, shape index: {}]
  %s1 = inlined_call_operand.hbm [shape: bf16[32,96], index: 1, kind: input, shape index: {}]
  %s2 = inlined_call_operand.vmem [shape: f32[1,96], index: 2, kind: input, shape index: {}]
  %s3 = inlined_call_operand.hbm [shape: bf16[4,8,32], index: 3, kind: input, shape index: {}]
  %s4 = inlined_call_operand.vmem [shape: f32[1,32], index: 4, kind: input, shape index: {}]
  %s5 = inlined_call_operand.hbm [shape: f32[2,8,32], index: 5, kind: output, shape index: {}]
  %s6 = sld [smem:[#allocation0]]
  $region65: #{tpu_custom_call.1} parent=0
    _
  %s8 = ssub.s32 1, %s6
  %s9 = scalar_select 0, %s8, %s6
  $region1: #{tpu_custom_call.1} parent=0
    #allocation2 [shape = 'u8[8192]{0}', space=vmem, size = 0x2000, scoped, tag = 'input window, operand 0']
    #allocation3 [shape = 's32[2]{0}', space=sflag, size = 0x8, scoped, tag = 'scoped memory for tpu_custom_call.1']
    #allocation4 [shape = 's32[2]{0}', space=sflag, size = 0x8, scoped, tag = 'scoped memory for tpu_custom_call.1']
    #allocation5 [shape = 'u8[8192]{0}', space=vmem, size = 0x2000, scoped, tag = 'input window, operand 1, single buffered']
    #allocation6 [shape = 's32[1]{0}', space=sflag, size = 0x4, scoped, tag = 'scoped memory for tpu_custom_call.1']
    #allocation7 [shape = 'u8[8192]{0}', space=vmem, size = 0x2000, scoped, tag = 'input window, operand 3, single buffered']
    #allocation8 [shape = 'u8[8192]{0}', space=vmem, size = 0x2000, scoped, tag = 'output window, operand 0']
    %10 = vsyncpa [#allocation3], 0
    %s11 = scalar_lea.sflag [#allocation3], 1
    %12 = vsyncpa %s11, 0
    %13 = vsyncpa [#allocation6], 0
    %14 = vsyncpa [#allocation4], 0
    %s15 = scalar_lea.sflag [#allocation4], 1
    %16 = vsyncpa %s15, 0
    loop: start=0, step=1, limit=4
    $region2: #{tpu_custom_call.1} parent=1 // loop_pre_header
      _
    $region3: #{tpu_custom_call.1} parent=1 // loop_header
      %s18 = sphi 0, %s22
      %p19 = scmp.ge.s32.totalorder %s18, 4
      %s28 = sphi 0, %s30
      %s31 = sphi 0, %s28
      %s32 = sphi 0, %s31
      %s48 = sphi 0, %s32
      %s52 = sphi 0, %s52
      %s54 = sphi 0, %s52
      %s55 = sphi 0, %s54
      %s69 = sphi 0, %s55
      %s73 = sphi 0, %s73
      %s75 = sphi 0, %s73
      %s76 = sphi 0, %s75
      %s90 = sphi 0, %s76
      %s94 = sphi 0, %s94
      %s96 = sphi 0, %s94
      %s97 = sphi 0, %s96
      %s111 = sphi 0, %s97
      %s115 = sphi 0, %s115
      %s117 = sphi 0, %s115
      %s118 = sphi 0, %s117
      %s132 = sphi 0, %s118
      %s138 = sphi 0, %s140
      %s141 = sphi 0, %s138
      %s142 = sphi 0, %s141
      %s158 = sphi 0, %s142
    $region4: #{tpu_custom_call.1} parent=1 // loop_header_branch
      %21 = sbr.rel (%p19) target = $region8
    $region5: #{tpu_custom_call.1} parent=1 // loop_body
      %s23 = ssub.s32 %s18, 1
      %s24 = ssub.s32 %s18, 2
      %s25 = sadd.s32 %s18, 1
      %s26 = ssub.s32 %s18, %s25
      %p27 = scmp.eq.s32.totalorder %s26, 0
      %s29 = sadd.s32 %s28, 1
      %s30 = scalar_select %p27, %s28, %s29
      %p33 = pneg %p27
      %p34 = scmp.eq.s32.totalorder %s18, 1
      %p35 = por %p33, %p34
      %p36 = scmp.ne.s32.totalorder %s28, %s31
      %p37 = scmp.eq.s32.totalorder %s18, 0
      %p38 = por %p36, %p37
      %p39 = scmp.ne.s32.totalorder %s28, %s31
      %p40 = scmp.eq.s32.totalorder %s23, 1
      %p41 = por %p39, %p40
      %p42 = scmp.ne.s32.totalorder %s31, %s32
      %p43 = scmp.eq.s32.totalorder %s23, 0
      %p44 = por %p42, %p43
      %p45 = scmp.ne.s32.totalorder %s31, %s32
      %p46 = scmp.eq.s32.totalorder %s24, 1
      %p47 = por %p45, %p46
      %p49 = scmp.ne.s32.totalorder %s32, %s48
      %p50 = scmp.eq.s32.totalorder %s24, 0
      %p51 = por %p49, %p50
      %s53 = sadd.s32 %s52, 1
      %p56 = scmp.eq.s32.totalorder %s18, 1
      %p57 = scmp.ne.s32.totalorder %s52, %s54
      %p58 = scmp.eq.s32.totalorder %s18, 0
      %p59 = por %p57, %p58
      %p60 = scmp.ne.s32.totalorder %s52, %s54
      %p61 = scmp.eq.s32.totalorder %s23, 1
      %p62 = por %p60, %p61
      %p63 = scmp.ne.s32.totalorder %s54, %s55
      %p64 = scmp.eq.s32.totalorder %s23, 0
      %p65 = por %p63, %p64
      %p66 = scmp.ne.s32.totalorder %s54, %s55
      %p67 = scmp.eq.s32.totalorder %s24, 1
      %p68 = por %p66, %p67
      %p70 = scmp.ne.s32.totalorder %s55, %s69
      %p71 = scmp.eq.s32.totalorder %s24, 0
      %p72 = por %p70, %p71
      %s74 = sadd.s32 %s73, 1
      %p77 = scmp.eq.s32.totalorder %s18, 1
      %p78 = scmp.ne.s32.totalorder %s73, %s75
      %p79 = scmp.eq.s32.totalorder %s18, 0
      %p80 = por %p78, %p79
      %p81 = scmp.ne.s32.totalorder %s73, %s75
      %p82 = scmp.eq.s32.totalorder %s23, 1
      %p83 = por %p81, %p82
      %p84 = scmp.ne.s32.totalorder %s75, %s76
      %p85 = scmp.eq.s32.totalorder %s23, 0
      %p86 = por %p84, %p85
      %p87 = scmp.ne.s32.totalorder %s75, %s76
      %p88 = scmp.eq.s32.totalorder %s24, 1
      %p89 = por %p87, %p88
      %p91 = scmp.ne.s32.totalorder %s76, %s90
      %p92 = scmp.eq.s32.totalorder %s24, 0
      %p93 = por %p91, %p92
      %s95 = sadd.s32 %s94, 1
      %p98 = scmp.eq.s32.totalorder %s18, 1
      %p99 = scmp.ne.s32.totalorder %s94, %s96
      %p100 = scmp.eq.s32.totalorder %s18, 0
      %p101 = por %p99, %p100
      %p102 = scmp.ne.s32.totalorder %s94, %s96
      %p103 = scmp.eq.s32.totalorder %s23, 1
      %p104 = por %p102, %p103
      %p105 = scmp.ne.s32.totalorder %s96, %s97
      %p106 = scmp.eq.s32.totalorder %s23, 0
      %p107 = por %p105, %p106
      %p108 = scmp.ne.s32.totalorder %s96, %s97
      %p109 = scmp.eq.s32.totalorder %s24, 1
      %p110 = por %p108, %p109
      %p112 = scmp.ne.s32.totalorder %s97, %s111
      %p113 = scmp.eq.s32.totalorder %s24, 0
      %p114 = por %p112, %p113
      %s116 = sadd.s32 %s115, 1
      %p119 = scmp.eq.s32.totalorder %s18, 1
      %p120 = scmp.ne.s32.totalorder %s115, %s117
      %p121 = scmp.eq.s32.totalorder %s18, 0
      %p122 = por %p120, %p121
      %p123 = scmp.ne.s32.totalorder %s115, %s117
      %p124 = scmp.eq.s32.totalorder %s23, 1
      %p125 = por %p123, %p124
      %p126 = scmp.ne.s32.totalorder %s117, %s118
      %p127 = scmp.eq.s32.totalorder %s23, 0
      %p128 = por %p126, %p127
      %p129 = scmp.ne.s32.totalorder %s117, %s118
      %p130 = scmp.eq.s32.totalorder %s24, 1
      %p131 = por %p129, %p130
      %p133 = scmp.ne.s32.totalorder %s118, %s132
      %p134 = scmp.eq.s32.totalorder %s24, 0
      %p135 = por %p133, %p134
      %s136 = ssub.s32 %s18, %s25
      %p137 = scmp.eq.s32.totalorder %s136, 0
      %s139 = sadd.s32 %s138, 1
      %s140 = scalar_select %p137, %s138, %s139
      %p143 = pneg %p137
      %p144 = scmp.eq.s32.totalorder %s18, 1
      %p145 = por %p143, %p144
      %p146 = scmp.ne.s32.totalorder %s138, %s141
      %p147 = scmp.eq.s32.totalorder %s18, 0
      %p148 = por %p146, %p147
      %p149 = scmp.ne.s32.totalorder %s138, %s141
      %p150 = scmp.eq.s32.totalorder %s23, 1
      %p151 = por %p149, %p150
      %p152 = scmp.ne.s32.totalorder %s141, %s142
      %p153 = scmp.eq.s32.totalorder %s23, 0
      %p154 = por %p152, %p153
      %p155 = scmp.ne.s32.totalorder %s141, %s142
      %p156 = scmp.eq.s32.totalorder %s24, 1
      %p157 = por %p155, %p156
      %p159 = scmp.ne.s32.totalorder %s142, %s158
      %p160 = scmp.eq.s32.totalorder %s24, 0
      %p161 = por %p159, %p160
      %p162 = scmp.le.s32.totalorder 1, %s18
      %p163 = scmp.lt.s32.totalorder %s18, 3
      %p164 = pnand %p162, %p163
      %p165 = pneg %p164
      // Predicated region
      $region9: #{tpu_custom_call.1} parent=5 // pred_check
        _
      $region10: #{tpu_custom_call.1} parent=5 // pred_check_branch
        %167 = sbr.rel (%p164) target = $region12
      $region11: #{tpu_custom_call.1} parent=5 // pred_region
        %s168 = ssub.s32 %s18, 1
        // Predicated region
        $region13: #{tpu_custom_call.1} parent=11 // pred_check
          %p169 = pneg %p65
        $region14: #{tpu_custom_call.1} parent=11 // pred_check_branch
          %171 = sbr.rel (%p169) target = $region16
        $region15: #{tpu_custom_call.1} parent=11 // pred_region
          %s173 = ssub.s32 256, 256
          %174 = vsyncadd [#allocation6], %s173
          %s175 = sshll.u32 [#allocation5], 4
          %s176 = int_to_ptr.vmem [resolvable:$true] %s175
          %181 = dma.hbm_to_vmem [thread:$0]  %s1, 256, %s176, [#allocation6], 64, 64, 4
        $region16: #{tpu_custom_call.1} parent=11 // pred_fallthru
          _
        // Predicated region
        $region17: #{tpu_custom_call.1} parent=11 // pred_check
          %p182 = pneg %p86
        $region18: #{tpu_custom_call.1} parent=11 // pred_check_branch
          %184 = sbr.rel (%p182) target = $region20
        $region19: #{tpu_custom_call.1} parent=11 // pred_region
          _
        $region20: #{tpu_custom_call.1} parent=11 // pred_fallthru
          _
        // Predicated region
        $region21: #{tpu_custom_call.1} parent=11 // pred_check
          %p185 = pneg %p107
        $region22: #{tpu_custom_call.1} parent=11 // pred_check_branch
          %187 = sbr.rel (%p185) target = $region24
        $region23: #{tpu_custom_call.1} parent=11 // pred_region
          %s189 = ssub.s32 256, 256
          %190 = vsyncadd [#allocation6], %s189
          %s191 = sshll.u32 [#allocation7], 4
          %s192 = int_to_ptr.vmem [resolvable:$true] %s191
          %197 = dma.hbm_to_vmem [thread:$0]  %s3, 256, %s192, [#allocation6], 64, 64, 4
        $region24: #{tpu_custom_call.1} parent=11 // pred_fallthru
          _
        // Predicated region
        $region25: #{tpu_custom_call.1} parent=11 // pred_check
          %p198 = pneg %p128
        $region26: #{tpu_custom_call.1} parent=11 // pred_check_branch
          %200 = sbr.rel (%p198) target = $region28
        $region27: #{tpu_custom_call.1} parent=11 // pred_region
          _
        $region28: #{tpu_custom_call.1} parent=11 // pred_fallthru
          _
      $region12: #{tpu_custom_call.1} parent=5 // pred_fallthru
        _
      %p201 = scmp.lt.s32.totalorder %s18, 2
      // Predicated region
      $region29: #{tpu_custom_call.1} parent=5 // pred_check
        %p202 = pneg %p201
      $region30: #{tpu_custom_call.1} parent=5 // pred_check_branch
        %204 = sbr.rel (%p202) target = $region32
      $region31: #{tpu_custom_call.1} parent=5 // pred_region
        // Predicated region
        $region33: #{tpu_custom_call.1} parent=31 // pred_check
          %p205 = pneg %p38
        $region34: #{tpu_custom_call.1} parent=31 // pred_check_branch
          %207 = sbr.rel (%p205) target = $region36
        $region35: #{tpu_custom_call.1} parent=31 // pred_region
          %s208 = sand.u32 %s28, 1
          %s209 = scalar_lea.sflag [#allocation3], %s208
          %s210 = sand.u32 %s28, 1
          %s211 = smul.addr %s210, 8
          %s212 = scalar_lea.vmem [#allocation2], %s211
          %s214 = ssub.s32 128, 128
          %215 = vsyncadd %s209, %s214
          %s216 = smul.addr %s18, 128
          %s217 = scalar_lea.hbm %s0, %s216
          %s219 = sshll.u32 %s212, 4
          %s220 = int_to_ptr.vmem [resolvable:$true] %s219
          %222 = dma.hbm_to_vmem [thread:$0]  %s217, 128, %s220, %s209
        $region36: #{tpu_custom_call.1} parent=31 // pred_fallthru
          _
      $region32: #{tpu_custom_call.1} parent=5 // pred_fallthru
        _
      %p223 = scmp.le.s32.totalorder 1, %s18
      %p224 = scmp.lt.s32.totalorder %s18, 3
      %p225 = pnand %p223, %p224
      %p226 = pneg %p225
      // Predicated region
      $region37: #{tpu_custom_call.1} parent=5 // pred_check
        _
      $region38: #{tpu_custom_call.1} parent=5 // pred_check_branch
        %228 = sbr.rel (%p225) target = $region40
      $region39: #{tpu_custom_call.1} parent=5 // pred_region
        %s229 = ssub.s32 %s18, 1
        %s230 = sand.u32 %s31, 1
        %s231 = scalar_lea.sflag [#allocation3], %s230
        %s232 = sand.u32 %s31, 1
        %s233 = smul.addr %s232, 8
        %s234 = scalar_lea.vmem [#allocation2], %s233
        // Predicated region
        $region41: #{tpu_custom_call.1} parent=39 // pred_check
          %p235 = pneg %p44
        $region42: #{tpu_custom_call.1} parent=39 // pred_check_branch
          %237 = sbr.rel (%p235) target = $region44
        $region43: #{tpu_custom_call.1} parent=39 // pred_region
          %238 = dma.done %s231, 128
        $region44: #{tpu_custom_call.1} parent=39 // pred_fallthru
          _
        // Predicated region
        $region45: #{tpu_custom_call.1} parent=39 // pred_check
          %p239 = pneg %p65
        $region46: #{tpu_custom_call.1} parent=39 // pred_check_branch
          %241 = sbr.rel (%p239) target = $region48
        $region47: #{tpu_custom_call.1} parent=39 // pred_region
          %242 = dma.done [#allocation6], 256
        $region48: #{tpu_custom_call.1} parent=39 // pred_fallthru
          _
        // Predicated region
        $region49: #{tpu_custom_call.1} parent=39 // pred_check
          %p243 = pneg %p107
        $region50: #{tpu_custom_call.1} parent=39 // pred_check_branch
          %245 = sbr.rel (%p243) target = $region52
        $region51: #{tpu_custom_call.1} parent=39 // pred_region
          %246 = dma.done [#allocation6], 256
        $region52: #{tpu_custom_call.1} parent=39 // pred_fallthru
          _
        %s247 = sand.u32 %s31, 1
        %s248 = scalar_lea.sflag [#allocation3], %s247
        %s249 = sand.u32 %s31, 1
        %s250 = smul.addr %s249, 8
        %s251 = scalar_lea.vmem [#allocation2], %s250
        %p252 = pneg %p44
        %p253 = pneg %p41
        %p254 = pneg %p65
        %p255 = pneg %p62
        %p256 = pneg %p86
        %p257 = pneg %p83
        %p258 = pneg %p107
        %p259 = pneg %p104
        %p260 = pneg %p128
        %p261 = pneg %p125
        %p262 = pneg %p154
        %p263 = pneg %p151
        %s264 = sand.u32 %s141, 1
        %s265 = scalar_lea.sflag [#allocation4], %s264
        %s266 = sand.u32 %s141, 1
        %s267 = smul.addr %s266, 8
        %s268 = scalar_lea.vmem [#allocation8], %s267
        %v270 = vld [vmem:[%s234] sm:$0xff]
        %v271 = vpack.c.bf16 %v270, %v270
        %v272 = vld [vmem:[#allocation5] sm:$0xf]
        %v273 = vld [vmem:[#allocation5 + $0x4] sm:$0xf]
        %v274 = vld [vmem:[#allocation5 + $0x8] sm:$0xf]
        %v275 = vld [vmem:[#allocation5 + $0xc] sm:$0xf]
        %v276 = vld [vmem:[%s2] sm:$0x1]
        %v278 = vlaneseq
        %v279 = vshrl.u32 %v278, 7
        %v280 = vsub.s32 0, %v279
        %v281 = vrot.slane %v276, %v280
        %v287 = vunpack.c.l.b16 %v272
        %v288 = vunpack.c.l.b16 %v273
        %v289 = vunpack.c.l.b16 %v274
        %v290 = vunpack.c.l.b16 %v275
        %v291 = vpack.c.b16 %v288, %v287
        %v292 = vpack.c.b16 %v290, %v289
        %vm295 = vcmask 261120
        %v297 = vsel %vm295, %v271, 0
        %299 = vmatprep.subr.bf16.mxu0 0
        %300 = vmatpush1.bf16.msra.mxu0 0
        %301 = vmatprep.subr.bf16.mxu0 0
        %302 = vmatpush1.bf16.msra.mxu0 0
        %303 = vmatprep.subr.bf16.mxu0 0
        %304 = vmatpush1.bf16.msra.mxu0 0
        %305 = vmatprep.subr.bf16.mxu0 0
        %306 = vmatpush1.bf16.msra.mxu0 0
        %307 = vmatprep.subr.bf16.mxu0 0
        %308 = vmatpush1.bf16.msra.mxu0 0
        %309 = vmatprep.subr.bf16.mxu0 0
        %310 = vmatpush1.bf16.msra.mxu0 0
        %311 = vmatprep.subr.bf16.mxu0 0
        %312 = vmatpush1.bf16.msra.mxu0 %v292
        %313 = vmatprep.subr.bf16.mxu0 0
        %314 = vmatpush1.bf16.msra.mxu0 %v291
        %315 = vmatprep.subr.bf16.mxu0 0
        %316 = vmatpush2.bf16.msra.mxu0 0
        %317 = vmatprep.subr.bf16.mxu0 0
        %318 = vmatpush2.bf16.msra.mxu0 0
        %319 = vmatprep.subr.bf16.mxu0 0
        %320 = vmatpush2.bf16.msra.mxu0 0
        %321 = vmatprep.subr.bf16.mxu0 0
        %322 = vmatpush2.bf16.msra.mxu0 0
        %323 = vmatprep.subr.bf16.mxu0 0
        %324 = vmatpush2.bf16.msra.mxu0 0
        %325 = vmatprep.subr.bf16.mxu0 0
        %326 = vmatpush2.bf16.msra.mxu0 0
        %327 = vmatprep.subr.bf16.mxu0 0
        %328 = vmatpush2.bf16.msra.mxu0 0
        %329 = vmatprep.subr.bf16.mxu0 0
        %330 = vmatpush2.bf16.msra.mxu0 0
        %331 = vmatprep.mubr.bf16.mxu0 0
        %332 = vmatmul.mubr.bf16.gmra.mxu0 %v297
        %v333 = vpop.f32.mrf.mxu0
        %v334 = vadd.f32 %v281, %v333
        %v335 = vpop.f32.mrf.mxu0
        %v336 = vpop.f32.mrf.mxu0
        %v337 = vpop.f32.mrf.mxu0
        %338 = vdwg.mxu0
        %v339 = vpack.c.bf16 %v334, %v334
        %341 = vrot.lane.b32.xlu0 %v339, 96
        %v342 = vpop.permute.xlu0 %341
        %vm343 = vcmask 64512
        %v345 = vsel %vm343, %v339, 0
        %v348 = vsel %vm343, %v342, 0
        %350 = vmatprep.subr.bf16.mxu0 0
        %351 = vmatpush1.bf16.xpose.msra.mxu0 0
        %352 = vmatprep.subr.bf16.mxu0 0
        %353 = vmatpush1.bf16.xpose.msra.mxu0 0
        %354 = vmatprep.subr.bf16.mxu0 0
        %355 = vmatpush1.bf16.xpose.msra.mxu0 0
        %356 = vmatprep.subr.bf16.mxu0 0
        %357 = vmatpush1.bf16.xpose.msra.mxu0 0
        %358 = vmatprep.subr.bf16.mxu0 0
        %359 = vmatpush1.bf16.xpose.msra.mxu0 0
        %360 = vmatprep.subr.bf16.mxu0 0
        %361 = vmatpush1.bf16.xpose.msra.mxu0 0
        %362 = vmatprep.subr.bf16.mxu0 0
        %363 = vmatpush1.bf16.xpose.msra.mxu0 0
        %364 = vmatprep.subr.bf16.mxu0 0
        %365 = vmatpush1.bf16.xpose.msra.mxu0 %v348
        %366 = vmatprep.subr.bf16.mxu0 0
        %367 = vmatpush2.bf16.xpose.msra.mxu0 0
        %368 = vmatprep.subr.bf16.mxu0 0
        %369 = vmatpush2.bf16.xpose.msra.mxu0 0
        %370 = vmatprep.subr.bf16.mxu0 0
        %371 = vmatpush2.bf16.xpose.msra.mxu0 0
        %372 = vmatprep.subr.bf16.mxu0 0
        %373 = vmatpush2.bf16.xpose.msra.mxu0 0
        %374 = vmatprep.subr.bf16.mxu0 0
        %375 = vmatpush2.bf16.xpose.msra.mxu0 0
        %376 = vmatprep.subr.bf16.mxu0 0
        %377 = vmatpush2.bf16.xpose.msra.mxu0 0
        %378 = vmatprep.subr.bf16.mxu0 0
        %379 = vmatpush2.bf16.xpose.msra.mxu0 0
        %380 = vmatprep.subr.bf16.mxu0 0
        %381 = vmatpush2.bf16.xpose.msra.mxu0 0
        %382 = vmatprep.mubr.bf16.mxu0 0
        %383 = vmatmul.mubr.bf16.gmra.mxu0 %v345
        %v384 = vpop.f32.mrf.mxu0
        %v385 = vadd.f32 0.0, %v384
        %v386 = vpop.f32.mrf.mxu0
        %v387 = vpop.f32.mrf.mxu0
        %v388 = vpop.f32.mrf.mxu0
        %389 = vdwg.mxu0
        %v390 = vsel %vm343, %v385, -inf
        %391 = vmax.xlane.f32.xlu0 %v390
        %v392 = vpop.xlane.xlu0 %391
        %v393 = vsub.f32 %v385, %v392
        %v394 = vmul.f32 %v393, 1.442695
        %v395 = vpow.pop %v394
        %v396 = vsel %vm343, %v395, 0.0
        %397 = vadd.xlane.f32.xlu0 %v396
        %v398 = vpop.xlane.xlu0 %397
        %v399 = vrcp.pop %v398
        %v400 = vmul.f32 %v395, %v399
        %v401 = vpack.c.bf16 %v400, %v400
        %402 = vrot.lane.b32.xlu0 %v339, 64
        %v403 = vpop.permute.xlu0 %402
        %v405 = vsel %vm343, %v401, 0
        %vm407 = vcmask 1043456
        %v409 = vsel %vm407, %v403, 0
        %411 = vmatprep.subr.bf16.mxu0 0
        %412 = vmatpush1.bf16.msra.mxu0 0
        %413 = vmatprep.subr.bf16.mxu0 0
        %414 = vmatpush1.bf16.msra.mxu0 0
        %415 = vmatprep.subr.bf16.mxu0 0
        %416 = vmatpush1.bf16.msra.mxu0 0
        %417 = vmatprep.subr.bf16.mxu0 0
        %418 = vmatpush1.bf16.msra.mxu0 0
        %419 = vmatprep.subr.bf16.mxu0 0
        %420 = vmatpush1.bf16.msra.mxu0 0
        %421 = vmatprep.subr.bf16.mxu0 0
        %422 = vmatpush1.bf16.msra.mxu0 0
        %423 = vmatprep.subr.bf16.mxu0 0
        %424 = vmatpush1.bf16.msra.mxu0 0
        %425 = vmatprep.subr.bf16.mxu0 0
        %426 = vmatpush1.bf16.msra.mxu0 %v409
        %427 = vmatprep.subr.bf16.mxu0 0
        %428 = vmatpush2.bf16.msra.mxu0 0
        %429 = vmatprep.subr.bf16.mxu0 0
        %430 = vmatpush2.bf16.msra.mxu0 0
        %431 = vmatprep.subr.bf16.mxu0 0
        %432 = vmatpush2.bf16.msra.mxu0 0
        %433 = vmatprep.subr.bf16.mxu0 0
        %434 = vmatpush2.bf16.msra.mxu0 0
        %435 = vmatprep.subr.bf16.mxu0 0
        %436 = vmatpush2.bf16.msra.mxu0 0
        %437 = vmatprep.subr.bf16.mxu0 0
        %438 = vmatpush2.bf16.msra.mxu0 0
        %439 = vmatprep.subr.bf16.mxu0 0
        %440 = vmatpush2.bf16.msra.mxu0 0
        %441 = vmatprep.subr.bf16.mxu0 0
        %442 = vmatpush2.bf16.msra.mxu0 0
        %443 = vmatprep.mubr.bf16.mxu0 0
        %444 = vmatmul.mubr.bf16.gmra.mxu0 %v405
        %v445 = vpop.f32.mrf.mxu0
        %v446 = vadd.f32 0.0, %v445
        %v447 = vpop.f32.mrf.mxu0
        %v448 = vpop.f32.mrf.mxu0
        %v449 = vpop.f32.mrf.mxu0
        %450 = vdwg.mxu0
        %v451 = vpack.c.bf16 %v446, %v446
        %v452 = vld [vmem:[#allocation7] sm:$0xf]
        %453 = vrot.lane.b32.xlu0 %v339, 120
        %v454 = vpop.permute.xlu0 %453
        %455 = vrot.lane.b32.xlu0 %v339, 88
        %v456 = vpop.permute.xlu0 %455
        %v458 = vsel %vm343, %v454, 0
        %v461 = vsel %vm343, %v456, 0
        %463 = vmatprep.subr.bf16.mxu0 0
        %464 = vmatpush1.bf16.xpose.msra.mxu0 0
        %465 = vmatprep.subr.bf16.mxu0 0
        %466 = vmatpush1.bf16.xpose.msra.mxu0 0
        %467 = vmatprep.subr.bf16.mxu0 0
        %468 = vmatpush1.bf16.xpose.msra.mxu0 0
        %469 = vmatprep.subr.bf16.mxu0 0
        %470 = vmatpush1.bf16.xpose.msra.mxu0 0
        %471 = vmatprep.subr.bf16.mxu0 0
        %472 = vmatpush1.bf16.xpose.msra.mxu0 0
        %473 = vmatprep.subr.bf16.mxu0 0
        %474 = vmatpush1.bf16.xpose.msra.mxu0 0
        %475 = vmatprep.subr.bf16.mxu0 0
        %476 = vmatpush1.bf16.xpose.msra.mxu0 0
        %477 = vmatprep.subr.bf16.mxu0 0
        %478 = vmatpush1.bf16.xpose.msra.mxu0 %v461
        %479 = vmatprep.subr.bf16.mxu0 0
        %480 = vmatpush2.bf16.xpose.msra.mxu0 0
        %481 = vmatprep.subr.bf16.mxu0 0
        %482 = vmatpush2.bf16.xpose.msra.mxu0 0
        %483 = vmatprep.subr.bf16.mxu0 0
        %484 = vmatpush2.bf16.xpose.msra.mxu0 0
        %485 = vmatprep.subr.bf16.mxu0 0
        %486 = vmatpush2.bf16.xpose.msra.mxu0 0
        %487 = vmatprep.subr.bf16.mxu0 0
        %488 = vmatpush2.bf16.xpose.msra.mxu0 0
        %489 = vmatprep.subr.bf16.mxu0 0
        %490 = vmatpush2.bf16.xpose.msra.mxu0 0
        %491 = vmatprep.subr.bf16.mxu0 0
        %492 = vmatpush2.bf16.xpose.msra.mxu0 0
        %493 = vmatprep.subr.bf16.mxu0 0
        %494 = vmatpush2.bf16.xpose.msra.mxu0 0
        %495 = vmatprep.mubr.bf16.mxu0 0
        %496 = vmatmul.mubr.bf16.gmra.mxu0 %v458
        %v497 = vpop.f32.mrf.mxu0
        %v498 = vadd.f32 0.0, %v497
        %v499 = vpop.f32.mrf.mxu0
        %v500 = vpop.f32.mrf.mxu0
        %v501 = vpop.f32.mrf.mxu0
        %502 = vdwg.mxu0
        %v503 = vsel %vm343, %v498, -inf
        %504 = vmax.xlane.f32.xlu0 %v503
        %v505 = vpop.xlane.xlu0 %504
        %v506 = vsub.f32 %v498, %v505
        %v507 = vmul.f32 %v506, 1.442695
        %v508 = vpow.pop %v507
        %v509 = vsel %vm343, %v508, 0.0
        %510 = vadd.xlane.f32.xlu0 %v509
        %v511 = vpop.xlane.xlu0 %510
        %v512 = vrcp.pop %v511
        %v513 = vmul.f32 %v508, %v512
        %v514 = vpack.c.bf16 %v513, %v513
        %515 = vrot.lane.b32.xlu0 %v339, 56
        %v516 = vpop.permute.xlu0 %515
        %v518 = vsel %vm343, %v514, 0
        %v521 = vsel %vm407, %v516, 0
        %523 = vmatprep.subr.bf16.mxu0 0
        %524 = vmatpush1.bf16.msra.mxu0 0
        %525 = vmatprep.subr.bf16.mxu0 0
        %526 = vmatpush1.bf16.msra.mxu0 0
        %527 = vmatprep.subr.bf16.mxu0 0
        %528 = vmatpush1.bf16.msra.mxu0 0
        %529 = vmatprep.subr.bf16.mxu0 0
        %530 = vmatpush1.bf16.msra.mxu0 0
        %531 = vmatprep.subr.bf16.mxu0 0
        %532 = vmatpush1.bf16.msra.mxu0 0
        %533 = vmatprep.subr.bf16.mxu0 0
        %534 = vmatpush1.bf16.msra.mxu0 0
        %535 = vmatprep.subr.bf16.mxu0 0
        %536 = vmatpush1.bf16.msra.mxu0 0
        %537 = vmatprep.subr.bf16.mxu0 0
        %538 = vmatpush1.bf16.msra.mxu0 %v521
        %539 = vmatprep.subr.bf16.mxu0 0
        %540 = vmatpush2.bf16.msra.mxu0 0
        %541 = vmatprep.subr.bf16.mxu0 0
        %542 = vmatpush2.bf16.msra.mxu0 0
        %543 = vmatprep.subr.bf16.mxu0 0
        %544 = vmatpush2.bf16.msra.mxu0 0
        %545 = vmatprep.subr.bf16.mxu0 0
        %546 = vmatpush2.bf16.msra.mxu0 0
        %547 = vmatprep.subr.bf16.mxu0 0
        %548 = vmatpush2.bf16.msra.mxu0 0
        %549 = vmatprep.subr.bf16.mxu0 0
        %550 = vmatpush2.bf16.msra.mxu0 0
        %551 = vmatprep.subr.bf16.mxu0 0
        %552 = vmatpush2.bf16.msra.mxu0 0
        %553 = vmatprep.subr.bf16.mxu0 0
        %554 = vmatpush2.bf16.msra.mxu0 0
        %555 = vmatprep.mubr.bf16.mxu0 0
        %556 = vmatmul.mubr.bf16.gmra.mxu0 %v518
        %v557 = vpop.f32.mrf.mxu0
        %v558 = vadd.f32 0.0, %v557
        %v559 = vpop.f32.mrf.mxu0
        %v560 = vpop.f32.mrf.mxu0
        %v561 = vpop.f32.mrf.mxu0
        %562 = vdwg.mxu0
        %v563 = vpack.c.bf16 %v558, %v558
        %s564 = scalar_lea.vmem [#allocation7], 4
        %v565 = vld [vmem:[%s564] sm:$0xf]
        %v567 = vsel %vm343, %v563, 0
        %v570 = vsel %vm407, %v565, 0
        %572 = vmatprep.subr.bf16.mxu0 0
        %573 = vmatpush1.bf16.msra.mxu0 0
        %574 = vmatprep.subr.bf16.mxu0 0
        %575 = vmatpush1.bf16.msra.mxu0 0
        %576 = vmatprep.subr.bf16.mxu0 0
        %577 = vmatpush1.bf16.msra.mxu0 0
        %578 = vmatprep.subr.bf16.mxu0 0
        %579 = vmatpush1.bf16.msra.mxu0 0
        %580 = vmatprep.subr.bf16.mxu0 0
        %581 = vmatpush1.bf16.msra.mxu0 0
        %582 = vmatprep.subr.bf16.mxu0 0
        %583 = vmatpush1.bf16.msra.mxu0 0
        %584 = vmatprep.subr.bf16.mxu0 0
        %585 = vmatpush1.bf16.msra.mxu0 0
        %586 = vmatprep.subr.bf16.mxu0 0
        %587 = vmatpush1.bf16.msra.mxu0 %v570
        %588 = vmatprep.subr.bf16.mxu0 0
        %589 = vmatpush2.bf16.msra.mxu0 0
        %590 = vmatprep.subr.bf16.mxu0 0
        %591 = vmatpush2.bf16.msra.mxu0 0
        %592 = vmatprep.subr.bf16.mxu0 0
        %593 = vmatpush2.bf16.msra.mxu0 0
        %594 = vmatprep.subr.bf16.mxu0 0
        %595 = vmatpush2.bf16.msra.mxu0 0
        %596 = vmatprep.subr.bf16.mxu0 0
        %597 = vmatpush2.bf16.msra.mxu0 0
        %598 = vmatprep.subr.bf16.mxu0 0
        %599 = vmatpush2.bf16.msra.mxu0 0
        %600 = vmatprep.subr.bf16.mxu0 0
        %601 = vmatpush2.bf16.msra.mxu0 0
        %602 = vmatprep.subr.bf16.mxu0 0
        %603 = vmatpush2.bf16.msra.mxu0 0
        %604 = vmatprep.mubr.bf16.mxu0 0
        %605 = vmatmul.mubr.bf16.gmra.mxu0 %v567
        %v606 = vpop.f32.mrf.mxu0
        %v607 = vadd.f32 0.0, %v606
        %v608 = vpop.f32.mrf.mxu0
        %v609 = vpop.f32.mrf.mxu0
        %v610 = vpop.f32.mrf.mxu0
        %611 = vdwg.mxu0
        %v613 = vsel %vm343, %v451, 0
        %v616 = vsel %vm407, %v452, 0
        %618 = vmatprep.subr.bf16.mxu0 0
        %619 = vmatpush1.bf16.msra.mxu0 0
        %620 = vmatprep.subr.bf16.mxu0 0
        %621 = vmatpush1.bf16.msra.mxu0 0
        %622 = vmatprep.subr.bf16.mxu0 0
        %623 = vmatpush1.bf16.msra.mxu0 0
        %624 = vmatprep.subr.bf16.mxu0 0
        %625 = vmatpush1.bf16.msra.mxu0 0
        %626 = vmatprep.subr.bf16.mxu0 0
        %627 = vmatpush1.bf16.msra.mxu0 0
        %628 = vmatprep.subr.bf16.mxu0 0
        %629 = vmatpush1.bf16.msra.mxu0 0
        %630 = vmatprep.subr.bf16.mxu0 0
        %631 = vmatpush1.bf16.msra.mxu0 0
        %632 = vmatprep.subr.bf16.mxu0 0
        %633 = vmatpush1.bf16.msra.mxu0 %v616
        %634 = vmatprep.subr.bf16.mxu0 0
        %635 = vmatpush2.bf16.msra.mxu0 0
        %636 = vmatprep.subr.bf16.mxu0 0
        %637 = vmatpush2.bf16.msra.mxu0 0
        %638 = vmatprep.subr.bf16.mxu0 0
        %639 = vmatpush2.bf16.msra.mxu0 0
        %640 = vmatprep.subr.bf16.mxu0 0
        %641 = vmatpush2.bf16.msra.mxu0 0
        %642 = vmatprep.subr.bf16.mxu0 0
        %643 = vmatpush2.bf16.msra.mxu0 0
        %644 = vmatprep.subr.bf16.mxu0 0
        %645 = vmatpush2.bf16.msra.mxu0 0
        %646 = vmatprep.subr.bf16.mxu0 0
        %647 = vmatpush2.bf16.msra.mxu0 0
        %648 = vmatprep.subr.bf16.mxu0 0
        %649 = vmatpush2.bf16.msra.mxu0 0
        %650 = vmatprep.mubr.bf16.mxu0 0
        %651 = vmatmul.mubr.bf16.gmra.mxu0 %v613
        %v652 = vpop.f32.mrf.mxu0
        %v653 = vadd.f32 %v607, %v652
        %v654 = vpop.f32.mrf.mxu0
        %v655 = vpop.f32.mrf.mxu0
        %v656 = vpop.f32.mrf.mxu0
        %657 = vdwg.mxu0
        %658 = vrot.lane.b32.xlu0 %v339, 112
        %v659 = vpop.permute.xlu0 %658
        %660 = vrot.lane.b32.xlu0 %v339, 80
        %v661 = vpop.permute.xlu0 %660
        %v663 = vsel %vm343, %v659, 0
        %v666 = vsel %vm343, %v661, 0
        %668 = vmatprep.subr.bf16.mxu0 0
        %669 = vmatpush1.bf16.xpose.msra.mxu0 0
        %670 = vmatprep.subr.bf16.mxu0 0
        %671 = vmatpush1.bf16.xpose.msra.mxu0 0
        %672 = vmatprep.subr.bf16.mxu0 0
        %673 = vmatpush1.bf16.xpose.msra.mxu0 0
        %674 = vmatprep.subr.bf16.mxu0 0
        %675 = vmatpush1.bf16.xpose.msra.mxu0 0
        %676 = vmatprep.subr.bf16.mxu0 0
        %677 = vmatpush1.bf16.xpose.msra.mxu0 0
        %678 = vmatprep.subr.bf16.mxu0 0
        %679 = vmatpush1.bf16.xpose.msra.mxu0 0
        %680 = vmatprep.subr.bf16.mxu0 0
        %681 = vmatpush1.bf16.xpose.msra.mxu0 0
        %682 = vmatprep.subr.bf16.mxu0 0
        %683 = vmatpush1.bf16.xpose.msra.mxu0 %v666
        %684 = vmatprep.subr.bf16.mxu0 0
        %685 = vmatpush2.bf16.xpose.msra.mxu0 0
        %686 = vmatprep.subr.bf16.mxu0 0
        %687 = vmatpush2.bf16.xpose.msra.mxu0 0
        %688 = vmatprep.subr.bf16.mxu0 0
        %689 = vmatpush2.bf16.xpose.msra.mxu0 0
        %690 = vmatprep.subr.bf16.mxu0 0
        %691 = vmatpush2.bf16.xpose.msra.mxu0 0
        %692 = vmatprep.subr.bf16.mxu0 0
        %693 = vmatpush2.bf16.xpose.msra.mxu0 0
        %694 = vmatprep.subr.bf16.mxu0 0
        %695 = vmatpush2.bf16.xpose.msra.mxu0 0
        %696 = vmatprep.subr.bf16.mxu0 0
        %697 = vmatpush2.bf16.xpose.msra.mxu0 0
        %698 = vmatprep.subr.bf16.mxu0 0
        %699 = vmatpush2.bf16.xpose.msra.mxu0 0
        %700 = vmatprep.mubr.bf16.mxu0 0
        %701 = vmatmul.mubr.bf16.gmra.mxu0 %v663
        %v702 = vpop.f32.mrf.mxu0
        %v703 = vadd.f32 0.0, %v702
        %v704 = vpop.f32.mrf.mxu0
        %v705 = vpop.f32.mrf.mxu0
        %v706 = vpop.f32.mrf.mxu0
        %707 = vdwg.mxu0
        %v708 = vsel %vm343, %v703, -inf
        %709 = vmax.xlane.f32.xlu0 %v708
        %v710 = vpop.xlane.xlu0 %709
        %v711 = vsub.f32 %v703, %v710
        %v712 = vmul.f32 %v711, 1.442695
        %v713 = vpow.pop %v712
        %v714 = vsel %vm343, %v713, 0.0
        %715 = vadd.xlane.f32.xlu0 %v714
        %v716 = vpop.xlane.xlu0 %715
        %v717 = vrcp.pop %v716
        %v718 = vmul.f32 %v713, %v717
        %v719 = vpack.c.bf16 %v718, %v718
        %720 = vrot.lane.b32.xlu0 %v339, 48
        %v721 = vpop.permute.xlu0 %720
        %v723 = vsel %vm343, %v719, 0
        %v726 = vsel %vm407, %v721, 0
        %728 = vmatprep.subr.bf16.mxu0 0
        %729 = vmatpush1.bf16.msra.mxu0 0
        %730 = vmatprep.subr.bf16.mxu0 0
        %731 = vmatpush1.bf16.msra.mxu0 0
        %732 = vmatprep.subr.bf16.mxu0 0
        %733 = vmatpush1.bf16.msra.mxu0 0
        %734 = vmatprep.subr.bf16.mxu0 0
        %735 = vmatpush1.bf16.msra.mxu0 0
        %736 = vmatprep.subr.bf16.mxu0 0
        %737 = vmatpush1.bf16.msra.mxu0 0
        %738 = vmatprep.subr.bf16.mxu0 0
        %739 = vmatpush1.bf16.msra.mxu0 0
        %740 = vmatprep.subr.bf16.mxu0 0
        %741 = vmatpush1.bf16.msra.mxu0 0
        %742 = vmatprep.subr.bf16.mxu0 0
        %743 = vmatpush1.bf16.msra.mxu0 %v726
        %744 = vmatprep.subr.bf16.mxu0 0
        %745 = vmatpush2.bf16.msra.mxu0 0
        %746 = vmatprep.subr.bf16.mxu0 0
        %747 = vmatpush2.bf16.msra.mxu0 0
        %748 = vmatprep.subr.bf16.mxu0 0
        %749 = vmatpush2.bf16.msra.mxu0 0
        %750 = vmatprep.subr.bf16.mxu0 0
        %751 = vmatpush2.bf16.msra.mxu0 0
        %752 = vmatprep.subr.bf16.mxu0 0
        %753 = vmatpush2.bf16.msra.mxu0 0
        %754 = vmatprep.subr.bf16.mxu0 0
        %755 = vmatpush2.bf16.msra.mxu0 0
        %756 = vmatprep.subr.bf16.mxu0 0
        %757 = vmatpush2.bf16.msra.mxu0 0
        %758 = vmatprep.subr.bf16.mxu0 0
        %759 = vmatpush2.bf16.msra.mxu0 0
        %760 = vmatprep.mubr.bf16.mxu0 0
        %761 = vmatmul.mubr.bf16.gmra.mxu0 %v723
        %v762 = vpop.f32.mrf.mxu0
        %v763 = vadd.f32 0.0, %v762
        %v764 = vpop.f32.mrf.mxu0
        %v765 = vpop.f32.mrf.mxu0
        %v766 = vpop.f32.mrf.mxu0
        %767 = vdwg.mxu0
        %v768 = vpack.c.bf16 %v763, %v763
        %s769 = scalar_lea.vmem [#allocation7], 8
        %v770 = vld [vmem:[%s769] sm:$0xf]
        %v772 = vsel %vm343, %v768, 0
        %v775 = vsel %vm407, %v770, 0
        %777 = vmatprep.subr.bf16.mxu0 0
        %778 = vmatpush1.bf16.msra.mxu0 0
        %779 = vmatprep.subr.bf16.mxu0 0
        %780 = vmatpush1.bf16.msra.mxu0 0
        %781 = vmatprep.subr.bf16.mxu0 0
        %782 = vmatpush1.bf16.msra.mxu0 0
        %783 = vmatprep.subr.bf16.mxu0 0
        %784 = vmatpush1.bf16.msra.mxu0 0
        %785 = vmatprep.subr.bf16.mxu0 0
        %786 = vmatpush1.bf16.msra.mxu0 0
        %787 = vmatprep.subr.bf16.mxu0 0
        %788 = vmatpush1.bf16.msra.mxu0 0
        %789 = vmatprep.subr.bf16.mxu0 0
        %790 = vmatpush1.bf16.msra.mxu0 0
        %791 = vmatprep.subr.bf16.mxu0 0
        %792 = vmatpush1.bf16.msra.mxu0 %v775
        %793 = vmatprep.subr.bf16.mxu0 0
        %794 = vmatpush2.bf16.msra.mxu0 0
        %795 = vmatprep.subr.bf16.mxu0 0
        %796 = vmatpush2.bf16.msra.mxu0 0
        %797 = vmatprep.subr.bf16.mxu0 0
        %798 = vmatpush2.bf16.msra.mxu0 0
        %799 = vmatprep.subr.bf16.mxu0 0
        %800 = vmatpush2.bf16.msra.mxu0 0
        %801 = vmatprep.subr.bf16.mxu0 0
        %802 = vmatpush2.bf16.msra.mxu0 0
        %803 = vmatprep.subr.bf16.mxu0 0
        %804 = vmatpush2.bf16.msra.mxu0 0
        %805 = vmatprep.subr.bf16.mxu0 0
        %806 = vmatpush2.bf16.msra.mxu0 0
        %807 = vmatprep.subr.bf16.mxu0 0
        %808 = vmatpush2.bf16.msra.mxu0 0
        %809 = vmatprep.mubr.bf16.mxu0 0
        %810 = vmatmul.mubr.bf16.gmra.mxu0 %v772
        %v811 = vpop.f32.mrf.mxu0
        %v812 = vadd.f32 0.0, %v811
        %v813 = vpop.f32.mrf.mxu0
        %v814 = vpop.f32.mrf.mxu0
        %v815 = vpop.f32.mrf.mxu0
        %816 = vdwg.mxu0
        %v817 = vadd.f32 %v653, %v812
        %818 = vrot.lane.b32.xlu0 %v339, 104
        %v819 = vpop.permute.xlu0 %818
        %820 = vrot.lane.b32.xlu0 %v339, 72
        %v821 = vpop.permute.xlu0 %820
        %v823 = vsel %vm343, %v819, 0
        %v826 = vsel %vm343, %v821, 0
        %828 = vmatprep.subr.bf16.mxu0 0
        %829 = vmatpush1.bf16.xpose.msra.mxu0 0
        %830 = vmatprep.subr.bf16.mxu0 0
        %831 = vmatpush1.bf16.xpose.msra.mxu0 0
        %832 = vmatprep.subr.bf16.mxu0 0
        %833 = vmatpush1.bf16.xpose.msra.mxu0 0
        %834 = vmatprep.subr.bf16.mxu0 0
        %835 = vmatpush1.bf16.xpose.msra.mxu0 0
        %836 = vmatprep.subr.bf16.mxu0 0
        %837 = vmatpush1.bf16.xpose.msra.mxu0 0
        %838 = vmatprep.subr.bf16.mxu0 0
        %839 = vmatpush1.bf16.xpose.msra.mxu0 0
        %840 = vmatprep.subr.bf16.mxu0 0
        %841 = vmatpush1.bf16.xpose.msra.mxu0 0
        %842 = vmatprep.subr.bf16.mxu0 0
        %843 = vmatpush1.bf16.xpose.msra.mxu0 %v826
        %844 = vmatprep.subr.bf16.mxu0 0
        %845 = vmatpush2.bf16.xpose.msra.mxu0 0
        %846 = vmatprep.subr.bf16.mxu0 0
        %847 = vmatpush2.bf16.xpose.msra.mxu0 0
        %848 = vmatprep.subr.bf16.mxu0 0
        %849 = vmatpush2.bf16.xpose.msra.mxu0 0
        %850 = vmatprep.subr.bf16.mxu0 0
        %851 = vmatpush2.bf16.xpose.msra.mxu0 0
        %852 = vmatprep.subr.bf16.mxu0 0
        %853 = vmatpush2.bf16.xpose.msra.mxu0 0
        %854 = vmatprep.subr.bf16.mxu0 0
        %855 = vmatpush2.bf16.xpose.msra.mxu0 0
        %856 = vmatprep.subr.bf16.mxu0 0
        %857 = vmatpush2.bf16.xpose.msra.mxu0 0
        %858 = vmatprep.subr.bf16.mxu0 0
        %859 = vmatpush2.bf16.xpose.msra.mxu0 0
        %860 = vmatprep.mubr.bf16.mxu0 0
        %861 = vmatmul.mubr.bf16.gmra.mxu0 %v823
        %v862 = vpop.f32.mrf.mxu0
        %v863 = vadd.f32 0.0, %v862
        %v864 = vpop.f32.mrf.mxu0
        %v865 = vpop.f32.mrf.mxu0
        %v866 = vpop.f32.mrf.mxu0
        %867 = vdwg.mxu0
        %v868 = vsel %vm343, %v863, -inf
        %869 = vmax.xlane.f32.xlu0 %v868
        %v870 = vpop.xlane.xlu0 %869
        %v871 = vsub.f32 %v863, %v870
        %v872 = vmul.f32 %v871, 1.442695
        %v873 = vpow.pop %v872
        %v874 = vsel %vm343, %v873, 0.0
        %875 = vadd.xlane.f32.xlu0 %v874
        %v876 = vpop.xlane.xlu0 %875
        %v877 = vrcp.pop %v876
        %v878 = vmul.f32 %v873, %v877
        %v879 = vpack.c.bf16 %v878, %v878
        %880 = vrot.lane.b32.xlu0 %v339, 40
        %v881 = vpop.permute.xlu0 %880
        %v883 = vsel %vm343, %v879, 0
        %v886 = vsel %vm407, %v881, 0
        %888 = vmatprep.subr.bf16.mxu0 0
        %889 = vmatpush1.bf16.msra.mxu0 0
        %890 = vmatprep.subr.bf16.mxu0 0
        %891 = vmatpush1.bf16.msra.mxu0 0
        %892 = vmatprep.subr.bf16.mxu0 0
        %893 = vmatpush1.bf16.msra.mxu0 0
        %894 = vmatprep.subr.bf16.mxu0 0
        %895 = vmatpush1.bf16.msra.mxu0 0
        %896 = vmatprep.subr.bf16.mxu0 0
        %897 = vmatpush1.bf16.msra.mxu0 0
        %898 = vmatprep.subr.bf16.mxu0 0
        %899 = vmatpush1.bf16.msra.mxu0 0
        %900 = vmatprep.subr.bf16.mxu0 0
        %901 = vmatpush1.bf16.msra.mxu0 0
        %902 = vmatprep.subr.bf16.mxu0 0
        %903 = vmatpush1.bf16.msra.mxu0 %v886
        %904 = vmatprep.subr.bf16.mxu0 0
        %905 = vmatpush2.bf16.msra.mxu0 0
        %906 = vmatprep.subr.bf16.mxu0 0
        %907 = vmatpush2.bf16.msra.mxu0 0
        %908 = vmatprep.subr.bf16.mxu0 0
        %909 = vmatpush2.bf16.msra.mxu0 0
        %910 = vmatprep.subr.bf16.mxu0 0
        %911 = vmatpush2.bf16.msra.mxu0 0
        %912 = vmatprep.subr.bf16.mxu0 0
        %913 = vmatpush2.bf16.msra.mxu0 0
        %914 = vmatprep.subr.bf16.mxu0 0
        %915 = vmatpush2.bf16.msra.mxu0 0
        %916 = vmatprep.subr.bf16.mxu0 0
        %917 = vmatpush2.bf16.msra.mxu0 0
        %918 = vmatprep.subr.bf16.mxu0 0
        %919 = vmatpush2.bf16.msra.mxu0 0
        %920 = vmatprep.mubr.bf16.mxu0 0
        %921 = vmatmul.mubr.bf16.gmra.mxu0 %v883
        %v922 = vpop.f32.mrf.mxu0
        %v923 = vadd.f32 0.0, %v922
        %v924 = vpop.f32.mrf.mxu0
        %v925 = vpop.f32.mrf.mxu0
        %v926 = vpop.f32.mrf.mxu0
        %927 = vdwg.mxu0
        %v928 = vpack.c.bf16 %v923, %v923
        %s929 = scalar_lea.vmem [#allocation7], 12
        %v930 = vld [vmem:[%s929] sm:$0xf]
        %v932 = vsel %vm343, %v928, 0
        %v935 = vsel %vm407, %v930, 0
        %937 = vmatprep.subr.bf16.mxu0 0
        %938 = vmatpush1.bf16.msra.mxu0 0
        %939 = vmatprep.subr.bf16.mxu0 0
        %940 = vmatpush1.bf16.msra.mxu0 0
        %941 = vmatprep.subr.bf16.mxu0 0
        %942 = vmatpush1.bf16.msra.mxu0 0
        %943 = vmatprep.subr.bf16.mxu0 0
        %944 = vmatpush1.bf16.msra.mxu0 0
        %945 = vmatprep.subr.bf16.mxu0 0
        %946 = vmatpush1.bf16.msra.mxu0 0
        %947 = vmatprep.subr.bf16.mxu0 0
        %948 = vmatpush1.bf16.msra.mxu0 0
        %949 = vmatprep.subr.bf16.mxu0 0
        %950 = vmatpush1.bf16.msra.mxu0 0
        %951 = vmatprep.subr.bf16.mxu0 0
        %952 = vmatpush1.bf16.msra.mxu0 %v935
        %953 = vmatprep.subr.bf16.mxu0 0
        %954 = vmatpush2.bf16.msra.mxu0 0
        %955 = vmatprep.subr.bf16.mxu0 0
        %956 = vmatpush2.bf16.msra.mxu0 0
        %957 = vmatprep.subr.bf16.mxu0 0
        %958 = vmatpush2.bf16.msra.mxu0 0
        %959 = vmatprep.subr.bf16.mxu0 0
        %960 = vmatpush2.bf16.msra.mxu0 0
        %961 = vmatprep.subr.bf16.mxu0 0
        %962 = vmatpush2.bf16.msra.mxu0 0
        %963 = vmatprep.subr.bf16.mxu0 0
        %964 = vmatpush2.bf16.msra.mxu0 0
        %965 = vmatprep.subr.bf16.mxu0 0
        %966 = vmatpush2.bf16.msra.mxu0 0
        %967 = vmatprep.subr.bf16.mxu0 0
        %968 = vmatpush2.bf16.msra.mxu0 0
        %969 = vmatprep.mubr.bf16.mxu0 0
        %970 = vmatmul.mubr.bf16.gmra.mxu0 %v932
        %v971 = vpop.f32.mrf.mxu0
        %v972 = vadd.f32 0.0, %v971
        %v973 = vpop.f32.mrf.mxu0
        %v974 = vpop.f32.mrf.mxu0
        %v975 = vpop.f32.mrf.mxu0
        %976 = vdwg.mxu0
        %v977 = vadd.f32 %v817, %v972
        %v978 = vld [vmem:[%s4] sm:$0x1]
        %v980 = vlaneseq
        %v981 = vshrl.u32 %v980, 7
        %v982 = vsub.s32 0, %v981
        %v983 = vrot.slane %v978, %v982
        %v985 = vadd.f32 %v977, %v983
        %986 = vst.msk [vmem:[%s268] sm:$0xff] %vm295, %v985
        %s987 = sand.u32 %s141, 1
        %s988 = scalar_lea.sflag [#allocation4], %s987
        %s989 = sand.u32 %s141, 1
        %s990 = smul.addr %s989, 8
        %s991 = scalar_lea.vmem [#allocation8], %s990
        // Predicated region
        $region53: #{tpu_custom_call.1} parent=39 // pred_check
          %p992 = pneg %p151
        $region54: #{tpu_custom_call.1} parent=39 // pred_check_branch
          %994 = sbr.rel (%p992) target = $region56
        $region55: #{tpu_custom_call.1} parent=39 // pred_region
          %s996 = ssub.s32 128, 128
          %997 = vsyncadd %s988, %s996
          %s998 = smul.addr %s23, 128
          %s999 = scalar_lea.hbm %s5, %s998
          %s1001 = sshll.u32 %s991, 4
          %s1002 = int_to_ptr.vmem [resolvable:$true] %s1001
          %1004 = dma.vmem_to_hbm [thread:$0]  %s1002, 128, %s999, %s988
        $region56: #{tpu_custom_call.1} parent=39 // pred_fallthru
          _
      $region40: #{tpu_custom_call.1} parent=5 // pred_fallthru
        _
      %p1005 = scmp.le.s32.totalorder 2, %s18
      // Predicated region
      $region57: #{tpu_custom_call.1} parent=5 // pred_check
        %p1006 = pneg %p1005
      $region58: #{tpu_custom_call.1} parent=5 // pred_check_branch
        %1008 = sbr.rel (%p1006) target = $region60
      $region59: #{tpu_custom_call.1} parent=5 // pred_region
        %s1009 = ssub.s32 %s18, 2
        // Predicated region
        $region61: #{tpu_custom_call.1} parent=59 // pred_check
          %p1010 = pneg %p157
        $region62: #{tpu_custom_call.1} parent=59 // pred_check_branch
          %1012 = sbr.rel (%p1010) target = $region64
        $region63: #{tpu_custom_call.1} parent=59 // pred_region
          %s1013 = sand.u32 %s142, 1
          %s1014 = scalar_lea.sflag [#allocation4], %s1013
          %s1015 = sand.u32 %s142, 1
          %s1016 = smul.addr %s1015, 8
          %s1017 = scalar_lea.vmem [#allocation8], %s1016
          %1018 = dma.done %s1014, 128
        $region64: #{tpu_custom_call.1} parent=59 // pred_fallthru
          _
      $region60: #{tpu_custom_call.1} parent=5 // pred_fallthru
        _
    $region6: #{tpu_custom_call.1} parent=1 // loop_footer
      %s22 = sadd.s32 1, %s18
    $region7: #{tpu_custom_call.1} parent=1 // loop_footer_branch
      %17 = sbr.rel target = $region3
    $region8: #{tpu_custom_call.1} parent=1 // loop_exit
      _
    %1019 = vsyncpa [#allocation3], 1
    %s1020 = scalar_lea.sflag [#allocation3], 1
    %1021 = vsyncpa %s1020, 1
    %1022 = vsyncpa [#allocation6], 1
    %1023 = vsyncpa [#allocation4], 1
    %s1024 = scalar_lea.sflag [#allocation4], 1
    %1025 = vsyncpa %s1024, 1

</llo_original>
